<compile_context>
chip_gen: v7x
topology: tpu7x:2x2x1
jax: 0.10.0
libtpu: 0.0.40
codegen_flags: <defaults>
</compile_context>

<pallas_src>
import math

import jax
import jax.numpy as jnp
from jax.experimental import pallas as pl
from jax.experimental.pallas import tpu as pltpu

LANE = 128          # padded feature width for hidden lanes
IN_PAD = 8          # 6 input features + bias-carrier lane (6) + 1 zero lane
OUT_PAD = 8         # 3 logits live in lanes 0..2 of an 8-lane output block
BIAS_LANE = 6       # input lane that carries a constant 1.0
HID = 50            # real hidden width
HID_ONE = 50        # hidden lane that carries a constant 1.0 through fc1
TM_MAX = 8192       # keep tiles comfortable for v7x's 64 MiB VMEM

# Row layout of the packed parameter slab (264, 128):
_W1_R0, _W1_R1 = 0, 8        # fc1:  rows 0..5 = w1, row 6 = b1 (+1.0 at lane 50)
_W2_R0, _W2_R1 = 8, 136      # fc2:  rows 0..49 = w2, row 50 = b2
_W3_R0, _W3_R1 = 136, 264    # head: rows 0..49 = w3, row 50 = b3
SLAB_ROWS = 264              # multiple of 8


def _round_up(n, m):
    return ((n + m - 1) // m) * m


def _qnet_kernel(x_ref, p_ref, o_ref):
    x = x_ref[...]                                   # (TM, 8), lane 6 == 1.0

    w1 = p_ref[_W1_R0:_W1_R1, :]                     # (8, 128)
    w2 = p_ref[_W2_R0:_W2_R1, :]                     # (128, 128)
    w3 = p_ref[_W3_R0:_W3_R1, :]                     # (128, 128)

    # fc1 + ReLU (bias folded in via the constant input lane); hidden lane 50
    # becomes exactly 1.0, padded lanes 51..127 stay exactly 0.
    h1 = jnp.maximum(jnp.dot(x, w1, preferred_element_type=jnp.float32), 0.0)
    # fc2 + ReLU (bias folded in via hidden lane 50; its own lane-50 output is 0).
    h2 = jnp.maximum(jnp.dot(h1, w2, preferred_element_type=jnp.float32), 0.0)
    # Residual: lanes 0..49 = x1 + x2, lane 50 = 1.0 (carries b3), rest 0.
    r = h1 + h2
    out = jnp.dot(r, w3, preferred_element_type=jnp.float32)   # (TM, 128)
    # Narrow writeback: only the first 8 lanes (logits in 0..2) hit HBM.
    o_ref[...] = out[:, :OUT_PAD]


def pack_params(params):
    """Pack w1,b1,w2,b2,w3,b3 (+ folded biases) into one (264, 128) f32 slab."""
    slab = jnp.zeros((SLAB_ROWS, LANE), jnp.float32)
    # fc1
    slab = slab.at[_W1_R0:_W1_R0 + 6, 0:HID].set(params["w1"].astype(jnp.float32))
    slab = slab.at[_W1_R0 + BIAS_LANE, 0:HID].set(
        params["b1"].reshape(-1).astype(jnp.float32))
    slab = slab.at[_W1_R0 + BIAS_LANE, HID_ONE].set(1.0)   # propagate constant 1
    # fc2 (column HID_ONE of this block stays 0 so h2[..., 50] == 0)
    slab = slab.at[_W2_R0:_W2_R0 + HID, 0:HID].set(params["w2"].astype(jnp.float32))
    slab = slab.at[_W2_R0 + HID_ONE, 0:HID].set(
        params["b2"].reshape(-1).astype(jnp.float32))
    # head
    slab = slab.at[_W3_R0:_W3_R0 + HID, 0:3].set(params["w3"].astype(jnp.float32))
    slab = slab.at[_W3_R0 + HID_ONE, 0:3].set(
        params["b3"].reshape(-1).astype(jnp.float32))
    return slab


def qnetwork_forward(x, params, *, tm=4096):
    """x: (B, 6) float. params: dict (w1..b3) or a pre-packed (264,128) slab.

    Intended usage: pre-pack the slab once and jax.jit this function so the
    input-pad and output-slice passes fuse around the pallas_call.
    """
    B = x.shape[0]
    slab = pack_params(params) if isinstance(params, dict) else params

    # Batch tile: round to a multiple of 8 (sublane rule), never larger than
    # the padded batch, hard-capped so v7x (64 MiB VMEM) stays comfortable.
    tm = _round_up(max(8, min(int(tm), TM_MAX, _round_up(B, 8))), 8)
    n_blk = pl.cdiv(B, tm)
    b_pad = n_blk * tm

    xp = jnp.zeros((b_pad, IN_PAD), jnp.float32)
    xp = xp.at[:B, :6].set(x.astype(jnp.float32))
    xp = xp.at[:B, BIAS_LANE].set(1.0)               # constant-1 bias carrier

    out = pl.pallas_call(
        _qnet_kernel,
        out_shape=jax.ShapeDtypeStruct((b_pad, OUT_PAD), jnp.float32),
        grid=(n_blk,),
        in_specs=[
            # batch-tiled activations (last dim 8 == full array dim -> legal)
            pl.BlockSpec((tm, IN_PAD), lambda i: (i, 0)),
            # weight slab: constant index_map -> fetched once, VMEM-resident
            pl.BlockSpec((SLAB_ROWS, LANE), lambda i: (0, 0)),
        ],
        # narrow, fully-covering output block (last dim 8 == full array dim)
        out_specs=pl.BlockSpec((tm, OUT_PAD), lambda i: (i, 0)),
        compiler_params=pltpu.CompilerParams(
            dimension_semantics=("parallel",),        # megacore sharding on v7x
            vmem_limit_bytes=32 * 1024 * 1024,        # safe on v5e/v6e/v7x
        ),
    )(xp, slab)

    return out[:B, :3]


def init_params(key):
    """Deterministic PyTorch-style init: U(-1/sqrt(fan_in), 1/sqrt(fan_in))."""
    dims = [(6, 50), (50, 50), (50, 3)]
    names = ["1", "2", "3"]
    params = {}
    for (fan_in, fan_out), n in zip(dims, names):
        key, kw, kb = jax.random.split(key, 3)
        bound = 1.0 / math.sqrt(fan_in)
        params["w" + n] = jax.random.uniform(
            kw, (fan_in, fan_out), jnp.float32, -bound, bound)
        params["b" + n] = jax.random.uniform(
            kb, (1, fan_out), jnp.float32, -bound, bound)
    return params


def reference_forward(x, params):
    """Pure-JAX reference for correctness checking."""
    h1 = jax.nn.relu(x @ params["w1"] + params["b1"])
    h2 = jax.nn.relu(h1 @ params["w2"] + params["b2"])
    return (h2 + h1) @ params["w3"] + params["b3"]


if __name__ == "__main__":
    key = jax.random.PRNGKey(0)
    key, kx1, kx2 = jax.random.split(key, 3)
    params = init_params(key)

    # Pre-pack the weight slab ONCE and jit the wrapper (perf feedback #2).
    slab = pack_params(params)
    fwd = jax.jit(qnetwork_forward, static_argnames=("tm",))

    # Small inference-style batch (acting in the environment).
    B1 = 8
    x1 = jax.random.normal(kx1, (B1, 6), jnp.float32)
    out1 = jax.block_until_ready(fwd(x1, slab))
    ref1 = reference_forward(x1, params)
    assert out1.shape == (B1, 3), out1.shape
    assert jnp.allclose(out1, ref1, atol=1e-5, rtol=1e-5), "mismatch (B=8)"

    # Replay-style batch: default (single large tile) path.
    B2 = 1000
    x2 = jax.random.normal(kx2, (B2, 6), jnp.float32)
    out2 = jax.block_until_ready(fwd(x2, slab))
    ref2 = reference_forward(x2, params)
    assert out2.shape == (B2, 3), out2.shape
    assert jnp.allclose(out2, ref2, atol=1e-4, rtol=1e-4), "mismatch (B=1000)"

    # Same batch through the multi-block grid path (tail padding + pipelining).
    out3 = jax.block_until_ready(fwd(x2, slab, tm=256))
    assert jnp.allclose(out3, ref2, atol=1e-4, rtol=1e-4), "mismatch (tm=256)"

    print("KERNEL_OK")
</pallas_src>

<mosaic_0001>
module attributes {stable_mosaic.version = 11 : i64} {
  func.func @_qnet_kernel(%arg0: i32, %arg1: memref<8x8xf32, #tpu.memory_space<vmem>>, %arg2: memref<264x128xf32, #tpu.memory_space<vmem>>, %arg3: memref<8x8xf32, #tpu.memory_space<vmem>>) attributes {dimension_semantics = [#tpu.dimension_semantics<parallel>], iteration_bounds = array<i64: 1>, scalar_prefetch = 0 : i64, scratch_operands = 0 : i64, tpu.core_type = #tpu.core_type<tc>, window_params = [{transform_indices = @transform_0, window_bounds = array<i64: 8, 8>}, {pipeline_mode = #tpu.pipeline_mode<synchronous>, transform_indices = @transform_1, window_bounds = array<i64: 264, 128>}, {transform_indices = @transform_2, window_bounds = array<i64: 8, 8>}]} {
    %c0 = arith.constant 0 : index
    %c0_0 = arith.constant 0 : index
    %0 = vector.load %arg1[%c0, %c0_0] : memref<8x8xf32, #tpu.memory_space<vmem>>, vector<8x8xf32>
    %c0_1 = arith.constant 0 : index
    %c0_2 = arith.constant 0 : index
    %1 = vector.load %arg2[%c0_1, %c0_2] : memref<264x128xf32, #tpu.memory_space<vmem>>, vector<8x128xf32>
    %c8 = arith.constant 8 : index
    %c0_3 = arith.constant 0 : index
    %2 = vector.load %arg2[%c8, %c0_3] : memref<264x128xf32, #tpu.memory_space<vmem>>, vector<128x128xf32>
    %c136 = arith.constant 136 : index
    %c0_4 = arith.constant 0 : index
    %3 = vector.load %arg2[%c136, %c0_4] : memref<264x128xf32, #tpu.memory_space<vmem>>, vector<128x128xf32>
    %cst = arith.constant dense<0.000000e+00> : vector<8x128xf32>
    %4 = tpu.matmul %0, %1, %cst {dimension_numbers = #tpu.dot_dimension_numbers<[1], [0], [0], [1], [0, 0, 1, 1], [], []>} : vector<8x8xf32>, vector<8x128xf32>, vector<8x128xf32> -> vector<8x128xf32>
    %cst_5 = arith.constant 0.000000e+00 : f32
    %5 = vector.broadcast %cst_5 : f32 to vector<8x128xf32>
    %6 = arith.maximumf %4, %5 : vector<8x128xf32>
    %cst_6 = arith.constant dense<0.000000e+00> : vector<8x128xf32>
    %7 = tpu.matmul %6, %2, %cst_6 {dimension_numbers = #tpu.dot_dimension_numbers<[1], [0], [0], [1], [0, 0, 1, 1], [], []>} : vector<8x128xf32>, vector<128x128xf32>, vector<8x128xf32> -> vector<8x128xf32>
    %cst_7 = arith.constant 0.000000e+00 : f32
    %8 = vector.broadcast %cst_7 : f32 to vector<8x128xf32>
    %9 = arith.maximumf %7, %8 : vector<8x128xf32>
    %10 = arith.addf %6, %9 : vector<8x128xf32>
    %cst_8 = arith.constant dense<0.000000e+00> : vector<8x128xf32>
    %11 = tpu.matmul %10, %3, %cst_8 {dimension_numbers = #tpu.dot_dimension_numbers<[1], [0], [0], [1], [0, 0, 1, 1], [], []>} : vector<8x128xf32>, vector<128x128xf32>, vector<8x128xf32> -> vector<8x128xf32>
    %12 = vector.extract_strided_slice %11 {offsets = [0, 0], sizes = [8, 8], strides = [1, 1]} : vector<8x128xf32> to vector<8x8xf32>
    %c0_9 = arith.constant 0 : index
    %c0_10 = arith.constant 0 : index
    %13 = vector.load %arg3[%c0_9, %c0_10] : memref<8x8xf32, #tpu.memory_space<vmem>>, vector<8x8xf32>
    tpu.vector_store %arg3[%c0_9, %c0_10], %12 {strides = array<i32>} : memref<8x8xf32, #tpu.memory_space<vmem>>, vector<8x8xf32>,
    return
  }
  func.func @transform_0(%arg0: i32) -> (i32, i32) {
    %c0_i32 = arith.constant 0 : i32
    %c0_i32_0 = arith.constant 0 : i32
    return %arg0, %c0_i32 : i32, i32
  }
  func.func @transform_1(%arg0: i32) -> (i32, i32) {
    %c0_i32 = arith.constant 0 : i32
    %c0_i32_0 = arith.constant 0 : i32
    %c0_i32_1 = arith.constant 0 : i32
    return %c0_i32, %c0_i32_0 : i32, i32
  }
  func.func @transform_2(%arg0: i32) -> (i32, i32) {
    %c0_i32 = arith.constant 0 : i32
    %c0_i32_0 = arith.constant 0 : i32
    return %arg0, %c0_i32 : i32, i32
  }
}

</mosaic_0001>

<llo_original>
// kernel: qnetwork_forward.1
$region0: #{qnetwork_forward.1}
  #allocation0 [shape = 'u32[]', space=smem, size = 0x4, offset = 0x4, fixed_abs, tag = 'smem constant byte address 0x4 - core index']
  #allocation1 [shape = 'u32[144,128]{1,0:T(1,128)}', space=vmem, size = 0x12000, scoped, tag = 'internal scratch']
  %s0 = inlined_call_operand.vmem [shape: f32[8,8], index: 0, kind: input, shape index: {}]
  %s1 = inlined_call_operand.hbm [shape: f32[264,128], index: 1, kind: input, shape index: {}]
  %s2 = inlined_call_operand.vmem [shape: f32[8,8], index: 2, kind: output, shape index: {}]
  %s3 = sld [smem:[#allocation0]]
  $region22: #{qnetwork_forward.1} parent=0
    _
  %s5 = ssub.s32 1, %s3
  %s6 = scalar_select 0, %s5, %s3
  $region1: #{qnetwork_forward.1} parent=0
    #allocation2 [shape = 'u8[135168]{0}', space=vmem, size = 0x21000, scoped, tag = 'input window, operand 1, single buffered']
    #allocation3 [shape = 's32[1]{0}', space=sflag, size = 0x4, scoped, tag = 'scoped memory for qnetwork_forward.1']
    %7 = vsyncpa [#allocation3], 0
    // Predicated region
    $region2: #{qnetwork_forward.1} parent=1 // pred_check
      _
    $region3: #{qnetwork_forward.1} parent=1 // pred_check_branch
      %9 = sbr.rel (0) target = $region5
    $region4: #{qnetwork_forward.1} parent=1 // pred_region
      _
    $region5: #{qnetwork_forward.1} parent=1 // pred_fallthru
      _
    // Predicated region
    $region6: #{qnetwork_forward.1} parent=1 // pred_check
      _
    $region7: #{qnetwork_forward.1} parent=1 // pred_check_branch
      %11 = sbr.rel (0) target = $region9
    $region8: #{qnetwork_forward.1} parent=1 // pred_region
      %s13 = ssub.s32 4224, 4224
      %14 = vsyncadd [#allocation3], %s13
      %s15 = sshll.u32 [#allocation2], 4
      %s16 = int_to_ptr.vmem [resolvable:$true] %s15
      %21 = dma.hbm_to_vmem [thread:$0]  %s1, 4224, %s16, [#allocation3], 128, 128, 8
    $region9: #{qnetwork_forward.1} parent=1 // pred_fallthru
      _
    // Predicated region
    $region10: #{qnetwork_forward.1} parent=1 // pred_check
      _
    $region11: #{qnetwork_forward.1} parent=1 // pred_check_branch
      %23 = sbr.rel (0) target = $region13
    $region12: #{qnetwork_forward.1} parent=1 // pred_region
      %24 = dma.done [#allocation3], 4224
    $region13: #{qnetwork_forward.1} parent=1 // pred_fallthru
      _
    %v25 = vld [vmem:[%s0] sm:$0xff]
    %v26 = vld [vmem:[#allocation2] sm:$0xff]
    %v27 = vld [vmem:[#allocation2 + $0x8] sm:$0xff]
    %v28 = vld [vmem:[#allocation2 + $0x10] sm:$0xff]
    %v29 = vld [vmem:[#allocation2 + $0x18] sm:$0xff]
    %v30 = vld [vmem:[#allocation2 + $0x20] sm:$0xff]
    %v31 = vld [vmem:[#allocation2 + $0x28] sm:$0xff]
    %v32 = vld [vmem:[#allocation2 + $0x30] sm:$0xff]
    %v33 = vld [vmem:[#allocation2 + $0x38] sm:$0xff]
    %v34 = vld [vmem:[#allocation2 + $0x40] sm:$0xff]
    %v35 = vld [vmem:[#allocation2 + $0x48] sm:$0xff]
    %v36 = vld [vmem:[#allocation2 + $0x50] sm:$0xff]
    %v37 = vld [vmem:[#allocation2 + $0x58] sm:$0xff]
    %v38 = vld [vmem:[#allocation2 + $0x60] sm:$0xff]
    %v39 = vld [vmem:[#allocation2 + $0x68] sm:$0xff]
    %v40 = vld [vmem:[#allocation2 + $0x70] sm:$0xff]
    %v41 = vld [vmem:[#allocation2 + $0x78] sm:$0xff]
    %v42 = vld [vmem:[#allocation2 + $0x80] sm:$0xff]
    %v43 = vld [vmem:[#allocation2 + $0x88] sm:$0xff]
    %v44 = vld [vmem:[#allocation2 + $0x90] sm:$0xff]
    %v45 = vld [vmem:[#allocation2 + $0x98] sm:$0xff]
    %v46 = vld [vmem:[#allocation2 + $0xa0] sm:$0xff]
    %v47 = vld [vmem:[#allocation2 + $0xa8] sm:$0xff]
    %v48 = vld [vmem:[#allocation2 + $0xb0] sm:$0xff]
    %v49 = vld [vmem:[#allocation2 + $0xb8] sm:$0xff]
    %v50 = vld [vmem:[#allocation2 + $0xc0] sm:$0xff]
    %v51 = vld [vmem:[#allocation2 + $0xc8] sm:$0xff]
    %v52 = vld [vmem:[#allocation2 + $0xd0] sm:$0xff]
    %v53 = vld [vmem:[#allocation2 + $0xd8] sm:$0xff]
    %v54 = vld [vmem:[#allocation2 + $0xe0] sm:$0xff]
    %v55 = vld [vmem:[#allocation2 + $0xe8] sm:$0xff]
    %v56 = vld [vmem:[#allocation2 + $0xf0] sm:$0xff]
    %v57 = vld [vmem:[#allocation2 + $0xf8] sm:$0xff]
    %v58 = vld [vmem:[#allocation2 + $0x100] sm:$0xff]
    %vm59 = vcmask 64512
    %v61 = vsel %vm59, %v25, 0
    %63 = vmatprep.subr.mxu0 0.0
    %64 = vmatpush1.msra.mxu0 %v26
    %65 = vmatprep.subr.mxu0 0.0
    %66 = vmatpush1.msra.mxu0 0.0
    %67 = vmatprep.subr.mxu0 0.0
    %68 = vmatpush1.msra.mxu0 0.0
    %69 = vmatprep.subr.mxu0 0.0
    %70 = vmatpush1.msra.mxu0 0.0
    %71 = vmatprep.subr.mxu0 0.0
    %72 = vmatpush1.msra.mxu0 0.0
    %73 = vmatprep.subr.mxu0 0.0
    %74 = vmatpush1.msra.mxu0 0.0
    %75 = vmatprep.subr.mxu0 0.0
    %76 = vmatpush1.msra.mxu0 0.0
    %77 = vmatprep.subr.mxu0 0.0
    %78 = vmatpush1.msra.mxu0 0.0
    %79 = vmatprep.subr.mxu0 0.0
    %80 = vmatpush1.msra.mxu0 0.0
    %81 = vmatprep.subr.mxu0 0.0
    %82 = vmatpush1.msra.mxu0 0.0
    %83 = vmatprep.subr.mxu0 0.0
    %84 = vmatpush1.msra.mxu0 0.0
    %85 = vmatprep.subr.mxu0 0.0
    %86 = vmatpush1.msra.mxu0 0.0
    %87 = vmatprep.subr.mxu0 0.0
    %88 = vmatpush1.msra.mxu0 0.0
    %89 = vmatprep.subr.mxu0 0.0
    %90 = vmatpush1.msra.mxu0 0.0
    %91 = vmatprep.subr.mxu0 0.0
    %92 = vmatpush1.msra.mxu0 0.0
    %93 = vmatprep.subr.mxu0 0.0
    %94 = vmatpush1.msra.mxu0 0.0
    %95 = vmatprep.subr.mxu0 0.0
    %96 = vmatpush1.msra.mxu0 0.0
    %97 = vmatprep.subr.mxu0 0.0
    %98 = vmatpush1.msra.mxu0 0.0
    %99 = vmatprep.subr.mxu0 0.0
    %100 = vmatpush1.msra.mxu0 0.0
    %101 = vmatprep.subr.mxu0 0.0
    %102 = vmatpush1.msra.mxu0 0.0
    %103 = vmatprep.subr.mxu0 0.0
    %104 = vmatpush1.msra.mxu0 0.0
    %105 = vmatprep.subr.mxu0 0.0
    %106 = vmatpush1.msra.mxu0 0.0
    %107 = vmatprep.subr.mxu0 0.0
    %108 = vmatpush1.msra.mxu0 0.0
    %109 = vmatprep.subr.mxu0 0.0
    %110 = vmatpush1.msra.mxu0 0.0
    %111 = vmatprep.subr.mxu0 0.0
    %112 = vmatpush1.msra.mxu0 0.0
    %113 = vmatprep.subr.mxu0 0.0
    %114 = vmatpush1.msra.mxu0 0.0
    %115 = vmatprep.subr.mxu0 0.0
    %116 = vmatpush1.msra.mxu0 0.0
    %117 = vmatprep.subr.mxu0 0.0
    %118 = vmatpush1.msra.mxu0 0.0
    %119 = vmatprep.subr.mxu0 0.0
    %120 = vmatpush1.msra.mxu0 0.0
    %121 = vmatprep.subr.mxu0 0.0
    %122 = vmatpush1.msra.mxu0 0.0
    %123 = vmatprep.subr.mxu0 0.0
    %124 = vmatpush1.msra.mxu0 0.0
    %125 = vmatprep.subr.mxu0 0.0
    %126 = vmatpush1.msra.mxu0 0.0
    %127 = vmatprep.mubr.f32.mxu0 0.0
    %128 = vmatmul.mubr.f32.gmra.mrb[0].mxu0 %v61
    %v129 = vpop.f32.mrb[0].mxu0
    %v130 = vadd.f32 0.0, %v129
    %v131 = vpop.f32.mrb[0].mxu0
    %132 = vdwg.mxu0
    %v133 = vmax.f32 %v130, 0.0
    %134 = vmatprep.subr.mxu0 0.0
    %135 = vmatpush1.msra.mxu0 %v27
    %136 = vmatprep.subr.mxu0 0.0
    %137 = vmatpush1.msra.mxu0 %v28
    %138 = vmatprep.subr.mxu0 0.0
    %139 = vmatpush1.msra.mxu0 %v29
    %140 = vmatprep.subr.mxu0 0.0
    %141 = vmatpush1.msra.mxu0 %v30
    %142 = vmatprep.subr.mxu0 0.0
    %143 = vmatpush1.msra.mxu0 %v31
    %144 = vmatprep.subr.mxu0 0.0
    %145 = vmatpush1.msra.mxu0 %v32
    %146 = vmatprep.subr.mxu0 0.0
    %147 = vmatpush1.msra.mxu0 %v33
    %148 = vmatprep.subr.mxu0 0.0
    %149 = vmatpush1.msra.mxu0 %v34
    %150 = vmatprep.subr.mxu0 0.0
    %151 = vmatpush1.msra.mxu0 %v35
    %152 = vmatprep.subr.mxu0 0.0
    %153 = vmatpush1.msra.mxu0 %v36
    %154 = vmatprep.subr.mxu0 0.0
    %155 = vmatpush1.msra.mxu0 %v37
    %156 = vmatprep.subr.mxu0 0.0
    %157 = vmatpush1.msra.mxu0 %v38
    %158 = vmatprep.subr.mxu0 0.0
    %159 = vmatpush1.msra.mxu0 %v39
    %160 = vmatprep.subr.mxu0 0.0
    %161 = vmatpush1.msra.mxu0 %v40
    %162 = vmatprep.subr.mxu0 0.0
    %163 = vmatpush1.msra.mxu0 %v41
    %164 = vmatprep.subr.mxu0 0.0
    %165 = vmatpush1.msra.mxu0 %v42
    %166 = vmatprep.subr.mxu0 0.0
    %167 = vmatpush1.msra.mxu0 0.0
    %168 = vmatprep.subr.mxu0 0.0
    %169 = vmatpush1.msra.mxu0 0.0
    %170 = vmatprep.subr.mxu0 0.0
    %171 = vmatpush1.msra.mxu0 0.0
    %172 = vmatprep.subr.mxu0 0.0
    %173 = vmatpush1.msra.mxu0 0.0
    %174 = vmatprep.subr.mxu0 0.0
    %175 = vmatpush1.msra.mxu0 0.0
    %176 = vmatprep.subr.mxu0 0.0
    %177 = vmatpush1.msra.mxu0 0.0
    %178 = vmatprep.subr.mxu0 0.0
    %179 = vmatpush1.msra.mxu0 0.0
    %180 = vmatprep.subr.mxu0 0.0
    %181 = vmatpush1.msra.mxu0 0.0
    %182 = vmatprep.subr.mxu0 0.0
    %183 = vmatpush1.msra.mxu0 0.0
    %184 = vmatprep.subr.mxu0 0.0
    %185 = vmatpush1.msra.mxu0 0.0
    %186 = vmatprep.subr.mxu0 0.0
    %187 = vmatpush1.msra.mxu0 0.0
    %188 = vmatprep.subr.mxu0 0.0
    %189 = vmatpush1.msra.mxu0 0.0
    %190 = vmatprep.subr.mxu0 0.0
    %191 = vmatpush1.msra.mxu0 0.0
    %192 = vmatprep.subr.mxu0 0.0
    %193 = vmatpush1.msra.mxu0 0.0
    %194 = vmatprep.subr.mxu0 0.0
    %195 = vmatpush1.msra.mxu0 0.0
    %196 = vmatprep.subr.mxu0 0.0
    %197 = vmatpush1.msra.mxu0 0.0
    %198 = vmatprep.mubr.f32.mxu0 0.0
    %199 = vmatmul.mubr.f32.gmra.mrb[0].mxu0 %v133
    %v200 = vpop.f32.mrb[0].mxu0
    %v201 = vadd.f32 0.0, %v200
    %v202 = vpop.f32.mrb[0].mxu0
    %203 = vdwg.mxu0
    %v204 = vmax.f32 %v201, 0.0
    %v205 = vadd.f32 %v133, %v204
    %206 = vmatprep.subr.mxu0 0.0
    %207 = vmatpush1.msra.mxu0 %v43
    %208 = vmatprep.subr.mxu0 0.0
    %209 = vmatpush1.msra.mxu0 %v44
    %210 = vmatprep.subr.mxu0 0.0
    %211 = vmatpush1.msra.mxu0 %v45
    %212 = vmatprep.subr.mxu0 0.0
    %213 = vmatpush1.msra.mxu0 %v46
    %214 = vmatprep.subr.mxu0 0.0
    %215 = vmatpush1.msra.mxu0 %v47
    %216 = vmatprep.subr.mxu0 0.0
    %217 = vmatpush1.msra.mxu0 %v48
    %218 = vmatprep.subr.mxu0 0.0
    %219 = vmatpush1.msra.mxu0 %v49
    %220 = vmatprep.subr.mxu0 0.0
    %221 = vmatpush1.msra.mxu0 %v50
    %222 = vmatprep.subr.mxu0 0.0
    %223 = vmatpush1.msra.mxu0 %v51
    %224 = vmatprep.subr.mxu0 0.0
    %225 = vmatpush1.msra.mxu0 %v52
    %226 = vmatprep.subr.mxu0 0.0
    %227 = vmatpush1.msra.mxu0 %v53
    %228 = vmatprep.subr.mxu0 0.0
    %229 = vmatpush1.msra.mxu0 %v54
    %230 = vmatprep.subr.mxu0 0.0
    %231 = vmatpush1.msra.mxu0 %v55
    %232 = vmatprep.subr.mxu0 0.0
    %233 = vmatpush1.msra.mxu0 %v56
    %234 = vmatprep.subr.mxu0 0.0
    %235 = vmatpush1.msra.mxu0 %v57
    %236 = vmatprep.subr.mxu0 0.0
    %237 = vmatpush1.msra.mxu0 %v58
    %238 = vmatprep.subr.mxu0 0.0
    %239 = vmatpush1.msra.mxu0 0.0
    %240 = vmatprep.subr.mxu0 0.0
    %241 = vmatpush1.msra.mxu0 0.0
    %242 = vmatprep.subr.mxu0 0.0
    %243 = vmatpush1.msra.mxu0 0.0
    %244 = vmatprep.subr.mxu0 0.0
    %245 = vmatpush1.msra.mxu0 0.0
    %246 = vmatprep.subr.mxu0 0.0
    %247 = vmatpush1.msra.mxu0 0.0
    %248 = vmatprep.subr.mxu0 0.0
    %249 = vmatpush1.msra.mxu0 0.0
    %250 = vmatprep.subr.mxu0 0.0
    %251 = vmatpush1.msra.mxu0 0.0
    %252 = vmatprep.subr.mxu0 0.0
    %253 = vmatpush1.msra.mxu0 0.0
    %254 = vmatprep.subr.mxu0 0.0
    %255 = vmatpush1.msra.mxu0 0.0
    %256 = vmatprep.subr.mxu0 0.0
    %257 = vmatpush1.msra.mxu0 0.0
    %258 = vmatprep.subr.mxu0 0.0
    %259 = vmatpush1.msra.mxu0 0.0
    %260 = vmatprep.subr.mxu0 0.0
    %261 = vmatpush1.msra.mxu0 0.0
    %262 = vmatprep.subr.mxu0 0.0
    %263 = vmatpush1.msra.mxu0 0.0
    %264 = vmatprep.subr.mxu0 0.0
    %265 = vmatpush1.msra.mxu0 0.0
    %266 = vmatprep.subr.mxu0 0.0
    %267 = vmatpush1.msra.mxu0 0.0
    %268 = vmatprep.subr.mxu0 0.0
    %269 = vmatpush1.msra.mxu0 0.0
    %270 = vmatprep.mubr.f32.mxu0 0.0
    %271 = vmatmul.mubr.f32.gmra.mrb[0].mxu0 %v205
    %v272 = vpop.f32.mrb[0].mxu0
    %v273 = vadd.f32 0.0, %v272
    %v274 = vpop.f32.mrb[0].mxu0
    %275 = vdwg.mxu0
    %276 = vst.msk [vmem:[%s2] sm:$0xff] %vm59, %v273
    // Predicated region
    $region14: #{qnetwork_forward.1} parent=1 // pred_check
      _
    $region15: #{qnetwork_forward.1} parent=1 // pred_check_branch
      %278 = sbr.rel (0) target = $region17
    $region16: #{qnetwork_forward.1} parent=1 // pred_region
      _
    $region17: #{qnetwork_forward.1} parent=1 // pred_fallthru
      _
    // Predicated region
    $region18: #{qnetwork_forward.1} parent=1 // pred_check
      _
    $region19: #{qnetwork_forward.1} parent=1 // pred_check_branch
      %280 = sbr.rel (0) target = $region21
    $region20: #{qnetwork_forward.1} parent=1 // pred_region
      _
    $region21: #{qnetwork_forward.1} parent=1 // pred_fallthru
      _
    %281 = vsyncpa [#allocation3], 1

</llo_original>
